<compile_context>
chip_gen: v7x
topology: tpu7x:2x2x1
jax: 0.10.0
libtpu: 0.0.40
codegen_flags: <defaults>
</compile_context>

<pallas_src>
import jax
import jax.numpy as jnp
from jax import lax
from jax.experimental import pallas as pl
from jax.experimental.pallas import tpu as pltpu


_STATIC_UNROLL_MAX_C = 32


def _attn_kernel(x_ref, w_ref, b_ref, o_ref):
    # x_ref / o_ref: (1, C, ROWS, 128) VMEM tiles (pixels dense on sublane x lane axes)
    # w_ref: (C,) SMEM f32 1x1-conv weight;  b_ref: (1,) SMEM f32 bias
    C = x_ref.shape[1]

    if C <= _STATIC_UNROLL_MAX_C:
        # Full-width per-channel scalar FMA: every step touches a dense (ROWS, 128)
        # plane (all sublanes/lanes), f32 accumulation of a single small temporary.
        logits = x_ref[0, 0].astype(jnp.float32) * w_ref[0] + b_ref[0]
        for c in range(1, C):
            logits = logits + x_ref[0, c].astype(jnp.float32) * w_ref[c]
        att = jax.nn.sigmoid(logits)                                  # (ROWS, 128) f32, EUP
        # Multiply in f32 (PyTorch f32-module parity), cast only the stored result.
        o_ref[0] = (x_ref[0].astype(jnp.float32) * att[None]).astype(o_ref.dtype)
    else:
        # Realistic channel counts: rolled loops keep trace time / code size O(1) and the
        # (ROWS, 128) f32 accumulator in-register (no spill traffic proportional to C).
        def red_body(c, acc):
            return acc + x_ref[0, c].astype(jnp.float32) * w_ref[c]

        logits = lax.fori_loop(
            1, C, red_body,
            x_ref[0, 0].astype(jnp.float32) * w_ref[0] + b_ref[0],
            unroll=8)
        att = jax.nn.sigmoid(logits)                                  # (ROWS, 128) f32

        def mul_body(c, carry):
            o_ref[0, c] = (x_ref[0, c].astype(jnp.float32) * att).astype(o_ref.dtype)
            return carry

        lax.fori_loop(0, C, mul_body, 0, unroll=8)


def _pick_rows(R, C, itemsize, target_tile_bytes, n_batch, min_grid_steps=4):
    """Pick the sublane-row count of a (1, C, rows, 128) block.

    rows must be a multiple of 8 dividing R, or equal R (a full-extent block dim is
    always legal). Prefer the largest value that fits the VMEM budget while leaving
    >= min_grid_steps (and preferably an even number of) grid steps for the 2 v7x TCs.
    """
    bytes_per_row = max(1, C * 128 * itemsize)
    max_rows = max(8, (target_tile_bytes // bytes_per_row) // 8 * 8)
    cands = {r for r in range(8, R + 1, 8) if R % r == 0 and r <= max_rows}
    if R <= max_rows or not cands:
        # Full-extent fallback (always a legal block shape).
        # TODO(synk): masked remainder tiles for very large R with no /8 divisor.
        cands.add(R)

    def steps(r):
        return n_batch * ((R + r - 1) // r)

    pool = [r for r in cands if steps(r) >= min_grid_steps] or sorted(cands)
    even = [r for r in pool if steps(r) % 2 == 0]
    pool = even or pool
    return max(pool)


def attention_block(x_nchw, weight, bias, *, target_tile_bytes=4 << 20):
    """Spatial AttentionBlock forward.

    x_nchw: (N, C, H, W); weight: (1, C, 1, 1); bias: (1,). Returns (N, C, H, W).
    """
    N, C, H, W = x_nchw.shape
    S = H * W

    x3d = x_nchw.reshape(N, C, S)                       # free view (contiguous)
    w1d = weight.reshape(C).astype(jnp.float32)
    b1d = bias.reshape(1).astype(jnp.float32)

    # Lane-pad the spatial axis to a multiple of 128 so every block is lane-dense
    # (unmasked vst); padded pixels are computed then discarded.
    S_pad = -(-S // 128) * 128
    if S_pad != S:
        x3d = jnp.pad(x3d, ((0, 0), (0, 0), (0, S_pad - S)))
    R = S_pad // 128
    x4d = x3d.reshape(N, C, R, 128)                     # free view

    rows = _pick_rows(R, C, x4d.dtype.itemsize, target_tile_bytes, N)
    grid = (N, R // rows)

    out4d = pl.pallas_call(
        _attn_kernel,
        out_shape=jax.ShapeDtypeStruct((N, C, R, 128), x4d.dtype),
        grid_spec=pltpu.PrefetchScalarGridSpec(
            num_scalar_prefetch=0,
            grid=grid,
            in_specs=[
                # Dense (ROWS, 128) pixel planes per channel; C full-extent.
                pl.BlockSpec((1, C, rows, 128), lambda n, s: (n, 0, s, 0)),
                # Conv weight / bias as resident SMEM scalars (no VMEM padding).
                pl.BlockSpec(memory_space=pltpu.MemorySpace.SMEM),
                pl.BlockSpec(memory_space=pltpu.MemorySpace.SMEM),
            ],
            out_specs=pl.BlockSpec((1, C, rows, 128), lambda n, s: (n, 0, s, 0)),
        ),
        compiler_params=pltpu.CompilerParams(
            dimension_semantics=("parallel", "parallel"),
            vmem_limit_bytes=32 * 1024 * 1024,          # safe on v5e/v6e/v7x
        ),
    )(x4d, w1d, b1d)

    out3d = out4d.reshape(N, C, S_pad)
    if S_pad != S:
        out3d = out3d[:, :, :S]
    return out3d.reshape(N, C, H, W)


if __name__ == "__main__":
    key = jax.random.PRNGKey(0)
    kx, kw, kb = jax.random.split(key, 3)

    N, C, H, W = 2, 4, 16, 16
    x = jax.random.normal(kx, (N, C, H, W), dtype=jnp.float32)

    # Parameter shapes match nn.Conv2d(in_channels=C, out_channels=1, kernel_size=1)
    weight = jax.random.normal(kw, (1, C, 1, 1), dtype=jnp.float32) * 0.1
    bias = jax.random.normal(kb, (1,), dtype=jnp.float32) * 0.1

    out = attention_block(x, weight, bias)
    out = jax.block_until_ready(out)

    # Pure-JAX reference check
    logits = jnp.einsum("nchw,c->nhw", x, weight.reshape(C)) + bias[0]
    att = jax.nn.sigmoid(logits)[:, None, :, :]
    ref = x * att
    assert jnp.allclose(out, ref, atol=1e-5, rtol=1e-5), "mismatch vs reference"

    print("KERNEL_OK")
</pallas_src>

<mosaic_0001>
module attributes {stable_mosaic.version = 11 : i64} {
  func.func @_attn_kernel(%arg0: i32, %arg1: i32, %arg2: memref<1x4x2x128xf32, #tpu.memory_space<vmem>>, %arg3: memref<4xf32, #tpu.memory_space<smem>>, %arg4: memref<1xf32, #tpu.memory_space<smem>>, %arg5: memref<1x4x2x128xf32, #tpu.memory_space<vmem>>) attributes {dimension_semantics = [#tpu.dimension_semantics<parallel>, #tpu.dimension_semantics<parallel>], iteration_bounds = array<i64: 2, 1>, scalar_prefetch = 0 : i64, scratch_operands = 0 : i64, tpu.core_type = #tpu.core_type<tc>, window_params = [{transform_indices = @transform_0, window_bounds = array<i64: 1, 4, 2, 128>}, {transform_indices = @transform_1, window_bounds = array<i64: 4>}, {transform_indices = @transform_2, window_bounds = array<i64: 1>}, {transform_indices = @transform_3, window_bounds = array<i64: 1, 4, 2, 128>}]} {
    %c0 = arith.constant 0 : index
    %c0_0 = arith.constant 0 : index
    %c0_1 = arith.constant 0 : index
    %c0_2 = arith.constant 0 : index
    %0 = vector.load %arg2[%c0, %c0_0, %c0_1, %c0_2] : memref<1x4x2x128xf32, #tpu.memory_space<vmem>>, vector<1x1x2x128xf32>
    %1 = vector.shape_cast %0 : vector<1x1x2x128xf32> to vector<2x128xf32>
    %c0_3 = arith.constant 0 : index
    %2 = memref.load %arg3[%c0_3] : memref<4xf32, #tpu.memory_space<smem>>
    %3 = vector.broadcast %2 : f32 to vector<2x128xf32>
    %4 = arith.mulf %1, %3 : vector<2x128xf32>
    %c0_4 = arith.constant 0 : index
    %5 = memref.load %arg4[%c0_4] : memref<1xf32, #tpu.memory_space<smem>>
    %6 = vector.broadcast %5 : f32 to vector<2x128xf32>
    %7 = arith.addf %4, %6 : vector<2x128xf32>
    %c0_5 = arith.constant 0 : index
    %c1 = arith.constant 1 : index
    %c0_6 = arith.constant 0 : index
    %c0_7 = arith.constant 0 : index
    %8 = vector.load %arg2[%c0_5, %c1, %c0_6, %c0_7] : memref<1x4x2x128xf32, #tpu.memory_space<vmem>>, vector<1x1x2x128xf32>
    %9 = vector.shape_cast %8 : vector<1x1x2x128xf32> to vector<2x128xf32>
    %c1_8 = arith.constant 1 : index
    %10 = memref.load %arg3[%c1_8] : memref<4xf32, #tpu.memory_space<smem>>
    %11 = vector.broadcast %10 : f32 to vector<2x128xf32>
    %12 = arith.mulf %9, %11 : vector<2x128xf32>
    %13 = arith.addf %7, %12 : vector<2x128xf32>
    %c0_9 = arith.constant 0 : index
    %c2 = arith.constant 2 : index
    %c0_10 = arith.constant 0 : index
    %c0_11 = arith.constant 0 : index
    %14 = vector.load %arg2[%c0_9, %c2, %c0_10, %c0_11] : memref<1x4x2x128xf32, #tpu.memory_space<vmem>>, vector<1x1x2x128xf32>
    %15 = vector.shape_cast %14 : vector<1x1x2x128xf32> to vector<2x128xf32>
    %c2_12 = arith.constant 2 : index
    %16 = memref.load %arg3[%c2_12] : memref<4xf32, #tpu.memory_space<smem>>
    %17 = vector.broadcast %16 : f32 to vector<2x128xf32>
    %18 = arith.mulf %15, %17 : vector<2x128xf32>
    %19 = arith.addf %13, %18 : vector<2x128xf32>
    %c0_13 = arith.constant 0 : index
    %c3 = arith.constant 3 : index
    %c0_14 = arith.constant 0 : index
    %c0_15 = arith.constant 0 : index
    %20 = vector.load %arg2[%c0_13, %c3, %c0_14, %c0_15] : memref<1x4x2x128xf32, #tpu.memory_space<vmem>>, vector<1x1x2x128xf32>
    %21 = vector.shape_cast %20 : vector<1x1x2x128xf32> to vector<2x128xf32>
    %c3_16 = arith.constant 3 : index
    %22 = memref.load %arg3[%c3_16] : memref<4xf32, #tpu.memory_space<smem>>
    %23 = vector.broadcast %22 : f32 to vector<2x128xf32>
    %24 = arith.mulf %21, %23 : vector<2x128xf32>
    %25 = arith.addf %19, %24 : vector<2x128xf32>
    %26 = arith.negf %25 : vector<2x128xf32>
    %27 = math.exp %26 : vector<2x128xf32>
    %cst = arith.constant 1.000000e+00 : f32
    %28 = vector.broadcast %cst : f32 to vector<2x128xf32>
    %29 = arith.addf %28, %27 : vector<2x128xf32>
    %30 = arith.divf %28, %29 : vector<2x128xf32>
    %c0_17 = arith.constant 0 : index
    %c0_18 = arith.constant 0 : index
    %c0_19 = arith.constant 0 : index
    %c0_20 = arith.constant 0 : index
    %31 = vector.load %arg2[%c0_17, %c0_18, %c0_19, %c0_20] : memref<1x4x2x128xf32, #tpu.memory_space<vmem>>, vector<1x4x2x128xf32>
    %32 = vector.shape_cast %31 : vector<1x4x2x128xf32> to vector<4x2x128xf32>
    %33 = vector.shape_cast %30 : vector<2x128xf32> to vector<1x2x128xf32>
    %34 = vector.broadcast %33 : vector<1x2x128xf32> to vector<4x2x128xf32>
    %35 = arith.mulf %32, %34 : vector<4x2x128xf32>
    %c0_21 = arith.constant 0 : index
    %c0_22 = arith.constant 0 : index
    %c0_23 = arith.constant 0 : index
    %c0_24 = arith.constant 0 : index
    %36 = vector.load %arg5[%c0_21, %c0_22, %c0_23, %c0_24] : memref<1x4x2x128xf32, #tpu.memory_space<vmem>>, vector<1x4x2x128xf32>
    %37 = vector.shape_cast %36 : vector<1x4x2x128xf32> to vector<4x2x128xf32>
    %38 = vector.shape_cast %35 : vector<4x2x128xf32> to vector<1x4x2x128xf32>
    tpu.vector_store %arg5[%c0_21, %c0_22, %c0_23, %c0_24], %38 {strides = array<i32>} : memref<1x4x2x128xf32, #tpu.memory_space<vmem>>, vector<1x4x2x128xf32>,
    return
  }
  func.func @transform_0(%arg0: i32, %arg1: i32) -> (i32, i32, i32, i32) {
    %c0_i32 = arith.constant 0 : i32
    %c0_i32_0 = arith.constant 0 : i32
    %c0_i32_1 = arith.constant 0 : i32
    return %arg0, %c0_i32, %arg1, %c0_i32_0 : i32, i32, i32, i32
  }
  func.func @transform_1(%arg0: i32, %arg1: i32) -> i32 {
    %c0_i32 = arith.constant 0 : i32
    %c0_i32_0 = arith.constant 0 : i32
    return %c0_i32 : i32
  }
  func.func @transform_2(%arg0: i32, %arg1: i32) -> i32 {
    %c0_i32 = arith.constant 0 : i32
    %c0_i32_0 = arith.constant 0 : i32
    return %c0_i32 : i32
  }
  func.func @transform_3(%arg0: i32, %arg1: i32) -> (i32, i32, i32, i32) {
    %c0_i32 = arith.constant 0 : i32
    %c0_i32_0 = arith.constant 0 : i32
    %c0_i32_1 = arith.constant 0 : i32
    return %arg0, %c0_i32, %arg1, %c0_i32_0 : i32, i32, i32, i32
  }
}

</mosaic_0001>

<llo_original>
// kernel: tpu_custom_call.1
$region0: #{tpu_custom_call.1}
  #allocation0 [shape = 'u32[]', space=smem, size = 0x4, offset = 0x4, fixed_abs, tag = 'smem constant byte address 0x4 - core index']
  #allocation1 [shape = 'u32[144,128]{1,0:T(1,128)}', space=vmem, size = 0x12000, scoped, tag = 'internal scratch']
  #allocation2 [shape = 'f32[1]{0:T(128)S(6)}', space=smem, size = 0x200, scoped, tag = 'scoped memory for tpu_custom_call.1']
  %s0 = inlined_call_operand.hbm [shape: f32[2,4,2,128], index: 0, kind: input, shape index: {}]
  %s1 = inlined_call_operand.vmem [shape: f32[4], index: 1, kind: input, shape index: {}]
  %s2 = inlined_call_operand.<no memory space> [shape: f32[1], index: 2, kind: input, shape index: {}]
  %s3 = inlined_call_operand.hbm [shape: f32[2,4,2,128], index: 3, kind: output, shape index: {}]
  %s4 = sld [smem:[#allocation0]]
  $region53: #{tpu_custom_call.1} parent=0
    _
  %s6 = ssub.s32 1, %s4
  %s7 = scalar_select 0, %s6, %s4
  %8 = sst [smem:[#allocation2]] %s2
  $region1: #{tpu_custom_call.1} parent=0
    #allocation3 [shape = 'u8[8192]{0}', space=vmem, size = 0x2000, scoped, tag = 'input window, operand 0']
    #allocation4 [shape = 's32[2]{0}', space=sflag, size = 0x8, scoped, tag = 'scoped memory for tpu_custom_call.1']
    #allocation5 [shape = 's32[2]{0}', space=sflag, size = 0x8, scoped, tag = 'scoped memory for tpu_custom_call.1']
    #allocation6 [shape = 's32[2]{0}', space=sflag, size = 0x8, scoped, tag = 'scoped memory for tpu_custom_call.1']
    #allocation7 [shape = 'u8[512]{0}', space=smem, size = 0x200, scoped, tag = 'input window, operand 1, single buffered']
    #allocation8 [shape = 'u8[8192]{0}', space=vmem, size = 0x2000, scoped, tag = 'output window, operand 0']
    %9 = vsyncpa [#allocation4], 0
    %s10 = scalar_lea.sflag [#allocation4], 1
    %11 = vsyncpa %s10, 0
    %12 = vsyncpa [#allocation6], 0
    %13 = vsyncpa [#allocation5], 0
    %s14 = scalar_lea.sflag [#allocation5], 1
    %15 = vsyncpa %s14, 0
    loop: start=0, step=1, limit=4
    $region2: #{tpu_custom_call.1} parent=1 // loop_pre_header
      _
    $region3: #{tpu_custom_call.1} parent=1 // loop_header
      %s17 = sphi 0, %s21
      %p18 = scmp.ge.s32.totalorder %s17, 4
      %s24 = sphi 0, %s36
      %s25 = sphi 0, %s32
      %s26 = sphi 0, %s24
      %s27 = sphi 0, %s25
      %s28 = sphi 0, %s26
      %s29 = sphi 0, %s27
      %s41 = sphi 0, %s43
      %s44 = sphi 0, %s41
      %s45 = sphi 0, %s44
      %s61 = sphi 0, %s45
      %s65 = sphi 0, %s65
      %s67 = sphi 0, %s65
      %s68 = sphi 0, %s67
      %s82 = sphi 0, %s68
      %s86 = sphi 0, %s86
      %s88 = sphi 0, %s86
      %s89 = sphi 0, %s88
      %s103 = sphi 0, %s89
      %s111 = sphi 0, %s113
      %s114 = sphi 0, %s111
      %s115 = sphi 0, %s114
      %s131 = sphi 0, %s115
    $region4: #{tpu_custom_call.1} parent=1 // loop_header_branch
      %20 = sbr.rel (%p18) target = $region8
    $region5: #{tpu_custom_call.1} parent=1 // loop_body
      %s22 = ssub.s32 %s17, 1
      %s23 = ssub.s32 %s17, 2
      %s30 = sadd.s32 1, %s25
      %p31 = scmp.ge.s32.totalorder %s30, 1
      %s32 = scalar_select %p31, 0, %s30
      %s33 = sadd.s32 1, %s24
      %s34 = scalar_select %p31, %s33, %s24
      %p35 = scmp.ge.s32.totalorder %s34, 2
      %s36 = scalar_select %p35, 0, %s34
      %s37 = ssub.s32 %s24, %s36
      %s38 = ssub.s32 %s25, %s32
      %s39 = sor.u32 %s37, %s38
      %p40 = scmp.eq.s32.totalorder %s39, 0
      %s42 = sadd.s32 %s41, 1
      %s43 = scalar_select %p40, %s41, %s42
      %p46 = pneg %p40
      %p47 = scmp.eq.s32.totalorder %s17, 1
      %p48 = por %p46, %p47
      %p49 = scmp.ne.s32.totalorder %s41, %s44
      %p50 = scmp.eq.s32.totalorder %s17, 0
      %p51 = por %p49, %p50
      %p52 = scmp.ne.s32.totalorder %s41, %s44
      %p53 = scmp.eq.s32.totalorder %s22, 1
      %p54 = por %p52, %p53
      %p55 = scmp.ne.s32.totalorder %s44, %s45
      %p56 = scmp.eq.s32.totalorder %s22, 0
      %p57 = por %p55, %p56
      %p58 = scmp.ne.s32.totalorder %s44, %s45
      %p59 = scmp.eq.s32.totalorder %s23, 1
      %p60 = por %p58, %p59
      %p62 = scmp.ne.s32.totalorder %s45, %s61
      %p63 = scmp.eq.s32.totalorder %s23, 0
      %p64 = por %p62, %p63
      %s66 = sadd.s32 %s65, 1
      %p69 = scmp.eq.s32.totalorder %s17, 1
      %p70 = scmp.ne.s32.totalorder %s65, %s67
      %p71 = scmp.eq.s32.totalorder %s17, 0
      %p72 = por %p70, %p71
      %p73 = scmp.ne.s32.totalorder %s65, %s67
      %p74 = scmp.eq.s32.totalorder %s22, 1
      %p75 = por %p73, %p74
      %p76 = scmp.ne.s32.totalorder %s67, %s68
      %p77 = scmp.eq.s32.totalorder %s22, 0
      %p78 = por %p76, %p77
      %p79 = scmp.ne.s32.totalorder %s67, %s68
      %p80 = scmp.eq.s32.totalorder %s23, 1
      %p81 = por %p79, %p80
      %p83 = scmp.ne.s32.totalorder %s68, %s82
      %p84 = scmp.eq.s32.totalorder %s23, 0
      %p85 = por %p83, %p84
      %s87 = sadd.s32 %s86, 1
      %p90 = scmp.eq.s32.totalorder %s17, 1
      %p91 = scmp.ne.s32.totalorder %s86, %s88
      %p92 = scmp.eq.s32.totalorder %s17, 0
      %p93 = por %p91, %p92
      %p94 = scmp.ne.s32.totalorder %s86, %s88
      %p95 = scmp.eq.s32.totalorder %s22, 1
      %p96 = por %p94, %p95
      %p97 = scmp.ne.s32.totalorder %s88, %s89
      %p98 = scmp.eq.s32.totalorder %s22, 0
      %p99 = por %p97, %p98
      %p100 = scmp.ne.s32.totalorder %s88, %s89
      %p101 = scmp.eq.s32.totalorder %s23, 1
      %p102 = por %p100, %p101
      %p104 = scmp.ne.s32.totalorder %s89, %s103
      %p105 = scmp.eq.s32.totalorder %s23, 0
      %p106 = por %p104, %p105
      %s107 = ssub.s32 %s24, %s36
      %s108 = ssub.s32 %s25, %s32
      %s109 = sor.u32 %s107, %s108
      %p110 = scmp.eq.s32.totalorder %s109, 0
      %s112 = sadd.s32 %s111, 1
      %s113 = scalar_select %p110, %s111, %s112
      %p116 = pneg %p110
      %p117 = scmp.eq.s32.totalorder %s17, 1
      %p118 = por %p116, %p117
      %p119 = scmp.ne.s32.totalorder %s111, %s114
      %p120 = scmp.eq.s32.totalorder %s17, 0
      %p121 = por %p119, %p120
      %p122 = scmp.ne.s32.totalorder %s111, %s114
      %p123 = scmp.eq.s32.totalorder %s22, 1
      %p124 = por %p122, %p123
      %p125 = scmp.ne.s32.totalorder %s114, %s115
      %p126 = scmp.eq.s32.totalorder %s22, 0
      %p127 = por %p125, %p126
      %p128 = scmp.ne.s32.totalorder %s114, %s115
      %p129 = scmp.eq.s32.totalorder %s23, 1
      %p130 = por %p128, %p129
      %p132 = scmp.ne.s32.totalorder %s115, %s131
      %p133 = scmp.eq.s32.totalorder %s23, 0
      %p134 = por %p132, %p133
      %p135 = scmp.le.s32.totalorder 1, %s17
      %p136 = scmp.lt.s32.totalorder %s17, 3
      %p137 = pnand %p135, %p136
      %p138 = pneg %p137
      // Predicated region
      $region9: #{tpu_custom_call.1} parent=5 // pred_check
        _
      $region10: #{tpu_custom_call.1} parent=5 // pred_check_branch
        %140 = sbr.rel (%p137) target = $region12
      $region11: #{tpu_custom_call.1} parent=5 // pred_region
        %s141 = ssub.s32 %s17, 1
        // Predicated region
        $region13: #{tpu_custom_call.1} parent=11 // pred_check
          %p142 = pneg %p78
        $region14: #{tpu_custom_call.1} parent=11 // pred_check_branch
          %144 = sbr.rel (%p142) target = $region16
        $region15: #{tpu_custom_call.1} parent=11 // pred_region
          %s146 = ssub.s32 16, 16
          %147 = vsyncadd [#allocation6], %s146
          %s149 = sshll.u32 %s1, 4
          %s150 = int_to_ptr.vmem [resolvable:$true] %s149
          %152 = dma.vmem_to_smem %s150, 16, [#allocation7], [#allocation6]
        $region16: #{tpu_custom_call.1} parent=11 // pred_fallthru
          _
        // Predicated region
        $region17: #{tpu_custom_call.1} parent=11 // pred_check
          %p153 = pneg %p99
        $region18: #{tpu_custom_call.1} parent=11 // pred_check_branch
          %155 = sbr.rel (%p153) target = $region20
        $region19: #{tpu_custom_call.1} parent=11 // pred_region
          _
        $region20: #{tpu_custom_call.1} parent=11 // pred_fallthru
          _
      $region12: #{tpu_custom_call.1} parent=5 // pred_fallthru
        _
      %p156 = scmp.lt.s32.totalorder %s17, 2
      // Predicated region
      $region21: #{tpu_custom_call.1} parent=5 // pred_check
        %p157 = pneg %p156
      $region22: #{tpu_custom_call.1} parent=5 // pred_check_branch
        %159 = sbr.rel (%p157) target = $region24
      $region23: #{tpu_custom_call.1} parent=5 // pred_region
        // Predicated region
        $region25: #{tpu_custom_call.1} parent=23 // pred_check
          %p160 = pneg %p51
        $region26: #{tpu_custom_call.1} parent=23 // pred_check_branch
          %162 = sbr.rel (%p160) target = $region28
        $region27: #{tpu_custom_call.1} parent=23 // pred_region
          %s163 = sand.u32 %s41, 1
          %s164 = scalar_lea.sflag [#allocation4], %s163
          %s165 = sand.u32 %s41, 1
          %s166 = smul.addr %s165, 8
          %s167 = scalar_lea.vmem [#allocation3], %s166
          %s169 = ssub.s32 128, 128
          %170 = vsyncadd %s164, %s169
          %s171 = smul.addr %s24, 4
          %s172 = sadd.s32 %s25, %s171
          %s173 = smul.addr %s172, 32
          %s174 = scalar_lea.hbm %s0, %s173
          %s175 = sshll.u32 %s167, 4
          %s176 = int_to_ptr.vmem [resolvable:$true] %s175
          %181 = dma.hbm_to_vmem [thread:$0]  %s174, 128, %s176, %s164, 32, 32, 2
        $region28: #{tpu_custom_call.1} parent=23 // pred_fallthru
          _
      $region24: #{tpu_custom_call.1} parent=5 // pred_fallthru
        _
      %p182 = scmp.le.s32.totalorder 1, %s17
      %p183 = scmp.lt.s32.totalorder %s17, 3
      %p184 = pnand %p182, %p183
      %p185 = pneg %p184
      // Predicated region
      $region29: #{tpu_custom_call.1} parent=5 // pred_check
        _
      $region30: #{tpu_custom_call.1} parent=5 // pred_check_branch
        %187 = sbr.rel (%p184) target = $region32
      $region31: #{tpu_custom_call.1} parent=5 // pred_region
        %s188 = ssub.s32 %s17, 1
        %s189 = sand.u32 %s44, 1
        %s190 = scalar_lea.sflag [#allocation4], %s189
        %s191 = sand.u32 %s44, 1
        %s192 = smul.addr %s191, 8
        %s193 = scalar_lea.vmem [#allocation3], %s192
        // Predicated region
        $region33: #{tpu_custom_call.1} parent=31 // pred_check
          %p194 = pneg %p57
        $region34: #{tpu_custom_call.1} parent=31 // pred_check_branch
          %196 = sbr.rel (%p194) target = $region36
        $region35: #{tpu_custom_call.1} parent=31 // pred_region
          %197 = dma.done %s190, 128
        $region36: #{tpu_custom_call.1} parent=31 // pred_fallthru
          _
        // Predicated region
        $region37: #{tpu_custom_call.1} parent=31 // pred_check
          %p198 = pneg %p78
        $region38: #{tpu_custom_call.1} parent=31 // pred_check_branch
          %200 = sbr.rel (%p198) target = $region40
        $region39: #{tpu_custom_call.1} parent=31 // pred_region
          %201 = dma.done [#allocation6], 16
        $region40: #{tpu_custom_call.1} parent=31 // pred_fallthru
          _
        %202 = sfence
        %s203 = sand.u32 %s44, 1
        %s204 = scalar_lea.sflag [#allocation4], %s203
        %s205 = sand.u32 %s44, 1
        %s206 = smul.addr %s205, 8
        %s207 = scalar_lea.vmem [#allocation3], %s206
        %p208 = pneg %p57
        %p209 = pneg %p54
        %p210 = pneg %p78
        %p211 = pneg %p75
        %p212 = pneg %p99
        %p213 = pneg %p96
        %p214 = pneg %p127
        %p215 = pneg %p124
        %s216 = sand.u32 %s114, 1
        %s217 = scalar_lea.sflag [#allocation5], %s216
        %s218 = sand.u32 %s114, 1
        %s219 = smul.addr %s218, 8
        %s220 = scalar_lea.vmem [#allocation8], %s219
        %v221 = vld [vmem:[%s193] sm:$0x3]
        %s222 = sld [smem:[#allocation7]]
        %v223 = vstv %s222
        %v224 = vmul.f32 %v221, %v223
        %s225 = sld [smem:[#allocation2]]
        %v226 = vstv %s225
        %v227 = vadd.f32 %v224, %v226
        %s228 = scalar_lea.vmem %s193, 2 [#allocation3]
        %v229 = vld [vmem:[%s228] sm:$0x3]
        %s230 = sld [smem:[#allocation7 + $0x1]]
        %v231 = vstv %s230
        %v232 = vmul.f32 %v229, %v231
        %v233 = vadd.f32 %v227, %v232
        %s234 = scalar_lea.vmem %s193, 4 [#allocation3]
        %v235 = vld [vmem:[%s234] sm:$0x3]
        %s236 = sld [smem:[#allocation7 + $0x2]]
        %v237 = vstv %s236
        %v238 = vmul.f32 %v235, %v237
        %v239 = vadd.f32 %v233, %v238
        %s240 = scalar_lea.vmem %s193, 6 [#allocation3]
        %v241 = vld [vmem:[%s240] sm:$0x3]
        %s242 = sld [smem:[#allocation7 + $0x3]]
        %v243 = vstv %s242
        %v244 = vmul.f32 %v241, %v243
        %v245 = vadd.f32 %v239, %v244
        %v246 = vxor.u32 %v245, 2147483648
        %v247 = vmul.f32 %v246, 1.442695
        %v248 = vpow.pop %v247
        %v249 = vadd.f32 %v248, 1.0
        %v250 = vrcp.pop %v249
        %v251 = vmul.f32 1.0, %v250
        %v252 = vld [vmem:[%s193] sm:$0x3]
        %v253 = vld [vmem:[%s193 + $0x2] sm:$0x3]
        %v254 = vld [vmem:[%s193 + $0x4] sm:$0x3]
        %v255 = vld [vmem:[%s193 + $0x6] sm:$0x3]
        %v256 = vmul.f32 %v252, %v251
        %v257 = vmul.f32 %v253, %v251
        %v258 = vmul.f32 %v254, %v251
        %v259 = vmul.f32 %v255, %v251
        %260 = vst [vmem:[%s220] sm:$0x3] %v256
        %261 = vst [vmem:[%s220 + $0x2] sm:$0x3] %v257
        %262 = vst [vmem:[%s220 + $0x4] sm:$0x3] %v258
        %263 = vst [vmem:[%s220 + $0x6] sm:$0x3] %v259
        %s264 = sand.u32 %s114, 1
        %s265 = scalar_lea.sflag [#allocation5], %s264
        %s266 = sand.u32 %s114, 1
        %s267 = smul.addr %s266, 8
        %s268 = scalar_lea.vmem [#allocation8], %s267
        // Predicated region
        $region41: #{tpu_custom_call.1} parent=31 // pred_check
          %p269 = pneg %p124
        $region42: #{tpu_custom_call.1} parent=31 // pred_check_branch
          %271 = sbr.rel (%p269) target = $region44
        $region43: #{tpu_custom_call.1} parent=31 // pred_region
          %s273 = ssub.s32 128, 128
          %274 = vsyncadd %s265, %s273
          %s275 = smul.addr %s26, 4
          %s276 = sadd.s32 %s27, %s275
          %s277 = smul.addr %s276, 32
          %s278 = scalar_lea.hbm %s3, %s277
          %s279 = sshll.u32 %s268, 4
          %s280 = int_to_ptr.vmem [resolvable:$true] %s279
          %285 = dma.vmem_to_hbm [thread:$0]  %s280, 128, %s278, %s265, 32, 32, 2
        $region44: #{tpu_custom_call.1} parent=31 // pred_fallthru
          _
      $region32: #{tpu_custom_call.1} parent=5 // pred_fallthru
        _
      %p286 = scmp.le.s32.totalorder 2, %s17
      // Predicated region
      $region45: #{tpu_custom_call.1} parent=5 // pred_check
        %p287 = pneg %p286
      $region46: #{tpu_custom_call.1} parent=5 // pred_check_branch
        %289 = sbr.rel (%p287) target = $region48
      $region47: #{tpu_custom_call.1} parent=5 // pred_region
        %s290 = ssub.s32 %s17, 2
        // Predicated region
        $region49: #{tpu_custom_call.1} parent=47 // pred_check
          %p291 = pneg %p130
        $region50: #{tpu_custom_call.1} parent=47 // pred_check_branch
          %293 = sbr.rel (%p291) target = $region52
        $region51: #{tpu_custom_call.1} parent=47 // pred_region
          %s294 = sand.u32 %s115, 1
          %s295 = scalar_lea.sflag [#allocation5], %s294
          %s296 = sand.u32 %s115, 1
          %s297 = smul.addr %s296, 8
          %s298 = scalar_lea.vmem [#allocation8], %s297
          %299 = dma.done %s295, 128
        $region52: #{tpu_custom_call.1} parent=47 // pred_fallthru
          _
      $region48: #{tpu_custom_call.1} parent=5 // pred_fallthru
        _
    $region6: #{tpu_custom_call.1} parent=1 // loop_footer
      %s21 = sadd.s32 1, %s17
    $region7: #{tpu_custom_call.1} parent=1 // loop_footer_branch
      %16 = sbr.rel target = $region3
    $region8: #{tpu_custom_call.1} parent=1 // loop_exit
      _
    %300 = vsyncpa [#allocation4], 1
    %s301 = scalar_lea.sflag [#allocation4], 1
    %302 = vsyncpa %s301, 1
    %303 = vsyncpa [#allocation5], 1
    %s304 = scalar_lea.sflag [#allocation5], 1
    %305 = vsyncpa %s304, 1
    %306 = vsyncpa [#allocation6], 1
    %s307 = scalar_lea.sflag [#allocation6], 1
    %308 = vsyncpa %s307, 1

</llo_original>
